<compile_context>
chip_gen: v5e
topology: v5e:2x2
jax: 0.10.0
libtpu: 0.0.40
codegen_flags: <defaults>
</compile_context>

<pallas_src>
import functools
import math

import jax
import jax.numpy as jnp
from jax.experimental import pallas as pl
from jax.experimental.pallas import tpu as pltpu


# ----------------------------------------------------------------------------
# Pallas kernels
# ----------------------------------------------------------------------------

def _conv_branch_kernel(x_ref, w_ref, shift_ref, wc_ref, o_ref):
    """One site sequence per grid step.

    x_ref:     (1, T + 2*pad, C_in)  pre-padded daily features for this site
    w_ref:     (K, C_in, H_conv)     conv weight taps with BN scale folded in
    shift_ref: (1, H_conv)           folded conv bias + BN shift
    wc_ref:    (1, H_conv)           linear_combo weights for the conv features
    o_ref:     (1, T_out, 1)         per-day conv contribution to linear_combo
    """
    x = x_ref[0]                                   # (T + 2*pad, C_in)
    k_taps = w_ref.shape[0]
    t_out = o_ref.shape[1]
    h = w_ref.shape[2]

    acc = jnp.zeros((t_out, h), jnp.float32)
    for k in range(k_taps):                        # K is small (3/5): unrolled
        acc = acc + jnp.dot(x[k:k + t_out, :], w_ref[k],
                            preferred_element_type=jnp.float32)
    z = jnp.maximum(acc + shift_ref[...], 0.0)     # folded BatchNorm + ReLU
    # Conv half of linear_combo as a VPU multiply + lane reduction
    # (avoids a 1-output-column MXU dot and a wide intermediate writeback).
    o_ref[0] = jnp.sum(z * wc_ref[...], axis=-1, keepdims=True)


def _full_combo_kernel(xf_ref, w1_ref, t1_ref, w2_ref, b2_ref, wf_ref, cg_ref,
                       o_ref):
    """Row tile of the fully-connected branch fused with linear_combo.

    xf_ref: (TN, F)    w1_ref: (F, H1)   t1_ref: (1, H1)   [BN folded]
    w2_ref: (H1, H2)   b2_ref: (1, H2)   wf_ref: (1, H2)   [combo wts, full part]
    cg_ref: (TN, 1)    gathered conv contribution (+ combo bias)
    o_ref:  (TN, 1)
    """
    h = jnp.dot(xf_ref[...], w1_ref[...],
                preferred_element_type=jnp.float32) + t1_ref[...]
    h = jnp.maximum(h, 0.0)                        # folded BN + ReLU; dropout=id
    h2 = jnp.dot(h, w2_ref[...],
                 preferred_element_type=jnp.float32) + b2_ref[...]
    h2 = jnp.maximum(h2, 0.0)                      # ReLU; dropout=id
    # Full half of linear_combo as a VPU lane reduction, fused with the conv part.
    o_ref[...] = jnp.sum(h2 * wf_ref[...], axis=-1, keepdims=True) + cg_ref[...]


# ----------------------------------------------------------------------------
# Small helpers
# ----------------------------------------------------------------------------

def _round_up(x, m):
    return ((x + m - 1) // m) * m


def _fold_bn(gamma, beta, running_mean, running_var, eps=1e-5):
    scale = gamma / jnp.sqrt(running_var + eps)
    shift = beta - running_mean * scale
    return scale, shift


def _compiler_params(block_shapes):
    """Explicit VMEM budget from the f32 block sizes (double-buffering headroom),
    capped at v7x's 64 MiB physical VMEM."""
    block_bytes = 4 * sum(int(math.prod(s)) for s in block_shapes)
    limit = max(4 * block_bytes + (8 << 20), 16 << 20)
    limit = min(limit, 64 << 20)
    return pltpu.CompilerParams(dimension_semantics=("parallel",),
                                vmem_limit_bytes=int(limit))


# ----------------------------------------------------------------------------
# Forward pass wrapper (glue in plain JAX, hot paths in Pallas)
# ----------------------------------------------------------------------------

@functools.partial(jax.jit, static_argnames=("kernel_size", "padding"))
def cnn2_forward(params, input_conv, input_full, flat_gather_idx, kernel_size,
                 padding):
    B, C_in, T = input_conv.shape
    H_conv = params["conv_w"].shape[0]
    K = kernel_size
    T_out = T + 2 * padding - K + 1
    N, F = input_full.shape
    H1 = params["lin1_w"].shape[1]
    H2 = params["lin2_w"].shape[1]
    f32 = jnp.float32

    # ---- fold conv bias + eval-mode BatchNorm into the conv weights (once) ----
    scale_c, shift_c = _fold_bn(params["bn_conv_gamma"], params["bn_conv_beta"],
                                params["bn_conv_mean"], params["bn_conv_var"])
    # PyTorch conv weight (H, C_in, K) -> per-tap (K, C_in, H), scaled per channel.
    w_taps = jnp.transpose(params["conv_w"], (2, 1, 0)) * scale_c[None, None, :]
    conv_shift = (params["conv_b"] * scale_c + shift_c)[None, :]          # (1, H)
    wc = params["combo_w_conv"].reshape(1, H_conv)                        # (1, H)

    # ---- Kernel 1: conv branch, one site per grid step ("parallel") ----
    x_sites = jnp.transpose(input_conv, (0, 2, 1))                        # (B, T, C_in)
    x_sites = jnp.pad(x_sites, ((0, 0), (padding, padding), (0, 0)))      # (B, T+2p, C_in)
    Tp = T + 2 * padding

    conv_blocks = [(1, Tp, C_in), (K, C_in, H_conv), (1, H_conv), (1, H_conv),
                   (1, T_out, 1)]
    conv_contrib = pl.pallas_call(
        _conv_branch_kernel,
        out_shape=jax.ShapeDtypeStruct((B, T_out, 1), f32),
        grid=(B,),
        in_specs=[
            pl.BlockSpec((1, Tp, C_in), lambda b: (b, 0, 0)),
            pl.BlockSpec((K, C_in, H_conv), lambda b: (0, 0, 0)),
            pl.BlockSpec((1, H_conv), lambda b: (0, 0)),
            pl.BlockSpec((1, H_conv), lambda b: (0, 0)),
        ],
        out_specs=pl.BlockSpec((1, T_out, 1), lambda b: (b, 0, 0)),
        compiler_params=_compiler_params(conv_blocks),
    )(x_sites, w_taps, conv_shift, wc)

    # ---- tiny scalar gather of the selected site-days (XLA glue, N floats) ----
    conv_flat = conv_contrib.reshape(B * T_out)
    conv_gathered = jnp.take(conv_flat, flat_gather_idx, axis=0) \
        + params["combo_b"][0]                                            # (N,)

    # ---- fold eval-mode BatchNorm into linear_full ----
    scale_f, shift_f = _fold_bn(params["bn_full_gamma"], params["bn_full_beta"],
                                params["bn_full_mean"], params["bn_full_var"])
    w1f = params["lin1_w"] * scale_f[None, :]                             # (F, H1)
    t1f = (params["lin1_b"] * scale_f + shift_f)[None, :]                 # (1, H1)
    b2 = params["lin2_b"][None, :]                                        # (1, H2)
    wf = params["combo_w_full"].reshape(1, H2)                            # (1, H2)

    # ---- Kernel 2: full branch + combo, tiled over rows ("parallel") ----
    TN = min(512, _round_up(N, 8))
    N_pad = _round_up(N, TN)
    xf = jnp.pad(input_full, ((0, N_pad - N), (0, 0)))
    cg = jnp.pad(conv_gathered, ((0, N_pad - N),))[:, None]               # (N_pad, 1)

    full_blocks = [(TN, F), (F, H1), (1, H1), (H1, H2), (1, H2), (1, H2),
                   (TN, 1), (TN, 1)]
    out_pad = pl.pallas_call(
        _full_combo_kernel,
        out_shape=jax.ShapeDtypeStruct((N_pad, 1), f32),
        grid=(N_pad // TN,),
        in_specs=[
            pl.BlockSpec((TN, F), lambda i: (i, 0)),
            pl.BlockSpec((F, H1), lambda i: (0, 0)),
            pl.BlockSpec((1, H1), lambda i: (0, 0)),
            pl.BlockSpec((H1, H2), lambda i: (0, 0)),
            pl.BlockSpec((1, H2), lambda i: (0, 0)),
            pl.BlockSpec((1, H2), lambda i: (0, 0)),
            pl.BlockSpec((TN, 1), lambda i: (i, 0)),
        ],
        out_specs=pl.BlockSpec((TN, 1), lambda i: (i, 0)),
        compiler_params=_compiler_params(full_blocks),
    )(xf, w1f, t1f, params["lin2_w"], b2, wf, cg)

    return out_pad[:N]                                                    # (N, 1)


# ----------------------------------------------------------------------------
# Pure-JAX reference (eval semantics) for a correctness check
# ----------------------------------------------------------------------------

def _reference_forward(params, input_conv, input_full, flat_gather_idx,
                       kernel_size, padding):
    B, C_in, T = input_conv.shape
    H = params["conv_w"].shape[0]
    T_out = T + 2 * padding - kernel_size + 1
    scale_c, shift_c = _fold_bn(params["bn_conv_gamma"], params["bn_conv_beta"],
                                params["bn_conv_mean"], params["bn_conv_var"])
    xp = jnp.pad(input_conv, ((0, 0), (0, 0), (padding, padding)))
    y = jnp.zeros((B, H, T_out), jnp.float32)
    for k in range(kernel_size):
        y = y + jnp.einsum("oc,bct->bot", params["conv_w"][:, :, k],
                           xp[:, :, k:k + T_out])
    y = y + params["conv_b"][None, :, None]
    y = y * scale_c[None, :, None] + shift_c[None, :, None]
    y = jnp.maximum(y, 0.0)
    conv_rows = jnp.transpose(y, (0, 2, 1)).reshape(B * T_out, H)
    conv_g = conv_rows[flat_gather_idx]

    scale_f, shift_f = _fold_bn(params["bn_full_gamma"], params["bn_full_beta"],
                                params["bn_full_mean"], params["bn_full_var"])
    h = input_full @ params["lin1_w"] + params["lin1_b"]
    h = jnp.maximum(h * scale_f + shift_f, 0.0)
    h2 = jnp.maximum(h @ params["lin2_w"] + params["lin2_b"], 0.0)
    return (conv_g @ params["combo_w_conv"] + h2 @ params["combo_w_full"]
            + params["combo_b"])


# ----------------------------------------------------------------------------
# Deterministic parameter construction
# ----------------------------------------------------------------------------

def make_params(key, input_size_conv, hidden_size_conv, kernel_size,
                input_size_full, hidden_size_full, hidden_size2_full):
    ks = jax.random.split(key, 12)
    n = lambda k, s, sc=0.1: sc * jax.random.normal(k, s, dtype=jnp.float32)
    return {
        # Conv1d
        "conv_w": n(ks[0], (hidden_size_conv, input_size_conv, kernel_size)),
        "conv_b": n(ks[1], (hidden_size_conv,)),
        # BatchNorm1d (conv branch) — eval-mode stats
        "bn_conv_gamma": 1.0 + n(ks[2], (hidden_size_conv,)),
        "bn_conv_beta": n(ks[3], (hidden_size_conv,)),
        "bn_conv_mean": n(ks[4], (hidden_size_conv,)),
        "bn_conv_var": 1.0 + jnp.abs(n(ks[5], (hidden_size_conv,))),
        # linear_full
        "lin1_w": n(ks[6], (input_size_full, hidden_size_full)),
        "lin1_b": n(ks[7], (hidden_size_full,)),
        # BatchNorm1d (full branch)
        "bn_full_gamma": jnp.ones((hidden_size_full,), jnp.float32),
        "bn_full_beta": jnp.zeros((hidden_size_full,), jnp.float32),
        "bn_full_mean": jnp.zeros((hidden_size_full,), jnp.float32),
        "bn_full_var": jnp.ones((hidden_size_full,), jnp.float32),
        # linear2_full
        "lin2_w": n(ks[8], (hidden_size_full, hidden_size2_full)),
        "lin2_b": n(ks[9], (hidden_size2_full,)),
        # linear_combo (split into conv part / full part)
        "combo_w_conv": n(ks[10], (hidden_size_conv, 1)),
        "combo_w_full": n(ks[11], (hidden_size2_full, 1)),
        "combo_b": jnp.zeros((1,), jnp.float32),
    }


# ----------------------------------------------------------------------------
# Demo
# ----------------------------------------------------------------------------

if __name__ == "__main__":
    # Module hyperparameters (small)
    B, T = 2, 16
    input_size_conv, hidden_size_conv = 4, 8
    kernel_size, padding = 3, 1
    input_size_full, hidden_size_full, hidden_size2_full = 6, 16, 8

    key = jax.random.PRNGKey(0)
    k_par, k_conv, k_full = jax.random.split(key, 3)

    params = make_params(k_par, input_size_conv, hidden_size_conv, kernel_size,
                         input_size_full, hidden_size_full, hidden_size2_full)

    # Inputs
    input_conv = jax.random.normal(k_conv, (B, input_size_conv, T),
                                   dtype=jnp.float32)
    y_ind_by_site = [jnp.array([1, 3, 5, 7], dtype=jnp.int32),
                     jnp.array([0, 2, 4, 6, 8, 10], dtype=jnp.int32)]
    N = sum(int(v.shape[0]) for v in y_ind_by_site)          # = 10
    input_full = jax.random.normal(k_full, (N, input_size_full),
                                   dtype=jnp.float32)

    # Flatten per-site indices into row indices of the (B*T_out,) conv output.
    T_out = T + 2 * padding - kernel_size + 1
    flat_gather_idx = jnp.concatenate(
        [i * T_out + v for i, v in enumerate(y_ind_by_site)], axis=0)

    out = cnn2_forward(params, input_conv, input_full, flat_gather_idx,
                       kernel_size=kernel_size, padding=padding)
    out = jax.block_until_ready(out)
    assert out.shape == (N, 1), out.shape

    # Correctness check against a pure-JAX reference (same eval semantics).
    ref = _reference_forward(params, input_conv, input_full, flat_gather_idx,
                             kernel_size, padding)
    assert jnp.allclose(out, ref, atol=1e-4, rtol=1e-4), \
        (out - ref).max()

    print("KERNEL_OK")
</pallas_src>

<mosaic_0001>
module attributes {stable_mosaic.version = 11 : i64} {
  func.func @_conv_branch_kernel(%arg0: i32, %arg1: memref<1x18x4xf32, #tpu.memory_space<vmem>>, %arg2: memref<3x4x8xf32, #tpu.memory_space<vmem>>, %arg3: memref<1x8xf32, #tpu.memory_space<vmem>>, %arg4: memref<1x8xf32, #tpu.memory_space<vmem>>, %arg5: memref<1x16x1xf32, #tpu.memory_space<vmem>>) attributes {dimension_semantics = [#tpu.dimension_semantics<parallel>], iteration_bounds = array<i64: 2>, scalar_prefetch = 0 : i64, scratch_operands = 0 : i64, tpu.core_type = #tpu.core_type<tc>, window_params = [{transform_indices = @transform_0, window_bounds = array<i64: 1, 18, 4>}, {pipeline_mode = #tpu.pipeline_mode<synchronous>, transform_indices = @transform_1, window_bounds = array<i64: 3, 4, 8>}, {pipeline_mode = #tpu.pipeline_mode<synchronous>, transform_indices = @transform_2, window_bounds = array<i64: 1, 8>}, {pipeline_mode = #tpu.pipeline_mode<synchronous>, transform_indices = @transform_3, window_bounds = array<i64: 1, 8>}, {transform_indices = @transform_4, window_bounds = array<i64: 1, 16, 1>}]} {
    %c0 = arith.constant 0 : index
    %c0_0 = arith.constant 0 : index
    %c0_1 = arith.constant 0 : index
    %0 = vector.load %arg1[%c0, %c0_0, %c0_1] : memref<1x18x4xf32, #tpu.memory_space<vmem>>, vector<1x18x4xf32>
    %1 = vector.shape_cast %0 : vector<1x18x4xf32> to vector<18x4xf32>
    %cst = arith.constant 0.000000e+00 : f32
    %2 = vector.broadcast %cst : f32 to vector<16x8xf32>
    %3 = vector.extract_strided_slice %1 {offsets = [0, 0], sizes = [16, 4], strides = [1, 1]} : vector<18x4xf32> to vector<16x4xf32>
    %c0_2 = arith.constant 0 : index
    %c0_3 = arith.constant 0 : index
    %c0_4 = arith.constant 0 : index
    %4 = vector.load %arg2[%c0_2, %c0_3, %c0_4] : memref<3x4x8xf32, #tpu.memory_space<vmem>>, vector<1x4x8xf32>
    %5 = vector.shape_cast %4 : vector<1x4x8xf32> to vector<4x8xf32>
    %cst_5 = arith.constant dense<0.000000e+00> : vector<16x8xf32>
    %6 = tpu.matmul %3, %5, %cst_5 {dimension_numbers = #tpu.dot_dimension_numbers<[1], [0], [0], [1], [0, 0, 1, 1], [], []>} : vector<16x4xf32>, vector<4x8xf32>, vector<16x8xf32> -> vector<16x8xf32>
    %7 = arith.addf %2, %6 : vector<16x8xf32>
    %8 = vector.extract_strided_slice %1 {offsets = [1, 0], sizes = [16, 4], strides = [1, 1]} : vector<18x4xf32> to vector<16x4xf32>
    %c1 = arith.constant 1 : index
    %c0_6 = arith.constant 0 : index
    %c0_7 = arith.constant 0 : index
    %9 = vector.load %arg2[%c1, %c0_6, %c0_7] : memref<3x4x8xf32, #tpu.memory_space<vmem>>, vector<1x4x8xf32>
    %10 = vector.shape_cast %9 : vector<1x4x8xf32> to vector<4x8xf32>
    %cst_8 = arith.constant dense<0.000000e+00> : vector<16x8xf32>
    %11 = tpu.matmul %8, %10, %cst_8 {dimension_numbers = #tpu.dot_dimension_numbers<[1], [0], [0], [1], [0, 0, 1, 1], [], []>} : vector<16x4xf32>, vector<4x8xf32>, vector<16x8xf32> -> vector<16x8xf32>
    %12 = arith.addf %7, %11 : vector<16x8xf32>
    %13 = vector.extract_strided_slice %1 {offsets = [2, 0], sizes = [16, 4], strides = [1, 1]} : vector<18x4xf32> to vector<16x4xf32>
    %c2 = arith.constant 2 : index
    %c0_9 = arith.constant 0 : index
    %c0_10 = arith.constant 0 : index
    %14 = vector.load %arg2[%c2, %c0_9, %c0_10] : memref<3x4x8xf32, #tpu.memory_space<vmem>>, vector<1x4x8xf32>
    %15 = vector.shape_cast %14 : vector<1x4x8xf32> to vector<4x8xf32>
    %cst_11 = arith.constant dense<0.000000e+00> : vector<16x8xf32>
    %16 = tpu.matmul %13, %15, %cst_11 {dimension_numbers = #tpu.dot_dimension_numbers<[1], [0], [0], [1], [0, 0, 1, 1], [], []>} : vector<16x4xf32>, vector<4x8xf32>, vector<16x8xf32> -> vector<16x8xf32>
    %17 = arith.addf %12, %16 : vector<16x8xf32>
    %c0_12 = arith.constant 0 : index
    %c0_13 = arith.constant 0 : index
    %18 = vector.load %arg3[%c0_12, %c0_13] : memref<1x8xf32, #tpu.memory_space<vmem>>, vector<1x8xf32>
    %19 = vector.broadcast %18 : vector<1x8xf32> to vector<16x8xf32>
    %20 = arith.addf %17, %19 : vector<16x8xf32>
    %cst_14 = arith.constant 0.000000e+00 : f32
    %21 = vector.broadcast %cst_14 : f32 to vector<16x8xf32>
    %22 = arith.maximumf %20, %21 : vector<16x8xf32>
    %c0_15 = arith.constant 0 : index
    %c0_16 = arith.constant 0 : index
    %23 = vector.load %arg4[%c0_15, %c0_16] : memref<1x8xf32, #tpu.memory_space<vmem>>, vector<1x8xf32>
    %24 = vector.broadcast %23 : vector<1x8xf32> to vector<16x8xf32>
    %25 = arith.mulf %22, %24 : vector<16x8xf32>
    %cst_17 = arith.constant dense<0.000000e+00> : vector<16xf32>
    %26 = vector.multi_reduction <add>, %25, %cst_17 [1] : vector<16x8xf32> to vector<16xf32>
    %27 = vector.shape_cast %26 : vector<16xf32> to vector<16x1xf32>
    %c0_18 = arith.constant 0 : index
    %c0_19 = arith.constant 0 : index
    %c0_20 = arith.constant 0 : index
    %28 = vector.load %arg5[%c0_18, %c0_19, %c0_20] : memref<1x16x1xf32, #tpu.memory_space<vmem>>, vector<1x16x1xf32>
    %29 = vector.shape_cast %28 : vector<1x16x1xf32> to vector<16x1xf32>
    %30 = vector.shape_cast %27 : vector<16x1xf32> to vector<1x16x1xf32>
    tpu.vector_store %arg5[%c0_18, %c0_19, %c0_20], %30 {strides = array<i32>} : memref<1x16x1xf32, #tpu.memory_space<vmem>>, vector<1x16x1xf32>,
    return
  }
  func.func @transform_0(%arg0: i32) -> (i32, i32, i32) {
    %c0_i32 = arith.constant 0 : i32
    %c0_i32_0 = arith.constant 0 : i32
    %c0_i32_1 = arith.constant 0 : i32
    return %arg0, %c0_i32, %c0_i32_0 : i32, i32, i32
  }
  func.func @transform_1(%arg0: i32) -> (i32, i32, i32) {
    %c0_i32 = arith.constant 0 : i32
    %c0_i32_0 = arith.constant 0 : i32
    %c0_i32_1 = arith.constant 0 : i32
    %c0_i32_2 = arith.constant 0 : i32
    return %c0_i32, %c0_i32_0, %c0_i32_1 : i32, i32, i32
  }
  func.func @transform_2(%arg0: i32) -> (i32, i32) {
    %c0_i32 = arith.constant 0 : i32
    %c0_i32_0 = arith.constant 0 : i32
    %c0_i32_1 = arith.constant 0 : i32
    return %c0_i32, %c0_i32_0 : i32, i32
  }
  func.func @transform_3(%arg0: i32) -> (i32, i32) {
    %c0_i32 = arith.constant 0 : i32
    %c0_i32_0 = arith.constant 0 : i32
    %c0_i32_1 = arith.constant 0 : i32
    return %c0_i32, %c0_i32_0 : i32, i32
  }
  func.func @transform_4(%arg0: i32) -> (i32, i32, i32) {
    %c0_i32 = arith.constant 0 : i32
    %c0_i32_0 = arith.constant 0 : i32
    %c0_i32_1 = arith.constant 0 : i32
    return %arg0, %c0_i32, %c0_i32_0 : i32, i32, i32
  }
}

module attributes {stable_mosaic.version = 11 : i64} {
  func.func @_full_combo_kernel(%arg0: i32, %arg1: memref<16x6xf32, #tpu.memory_space<vmem>>, %arg2: memref<6x16xf32, #tpu.memory_space<vmem>>, %arg3: memref<1x16xf32, #tpu.memory_space<vmem>>, %arg4: memref<16x8xf32, #tpu.memory_space<vmem>>, %arg5: memref<1x8xf32, #tpu.memory_space<vmem>>, %arg6: memref<1x8xf32, #tpu.memory_space<vmem>>, %arg7: memref<16x1xf32, #tpu.memory_space<vmem>>, %arg8: memref<16x1xf32, #tpu.memory_space<vmem>>) attributes {dimension_semantics = [#tpu.dimension_semantics<parallel>], iteration_bounds = array<i64: 1>, scalar_prefetch = 0 : i64, scratch_operands = 0 : i64, tpu.core_type = #tpu.core_type<tc>, window_params = [{transform_indices = @transform_0, window_bounds = array<i64: 16, 6>}, {pipeline_mode = #tpu.pipeline_mode<synchronous>, transform_indices = @transform_1, window_bounds = array<i64: 6, 16>}, {pipeline_mode = #tpu.pipeline_mode<synchronous>, transform_indices = @transform_2, window_bounds = array<i64: 1, 16>}, {pipeline_mode = #tpu.pipeline_mode<synchronous>, transform_indices = @transform_3, window_bounds = array<i64: 16, 8>}, {pipeline_mode = #tpu.pipeline_mode<synchronous>, transform_indices = @transform_4, window_bounds = array<i64: 1, 8>}, {pipeline_mode = #tpu.pipeline_mode<synchronous>, transform_indices = @transform_5, window_bounds = array<i64: 1, 8>}, {transform_indices = @transform_6, window_bounds = array<i64: 16, 1>}, {transform_indices = @transform_7, window_bounds = array<i64: 16, 1>}]} {
    %c0 = arith.constant 0 : index
    %c0_0 = arith.constant 0 : index
    %0 = vector.load %arg1[%c0, %c0_0] : memref<16x6xf32, #tpu.memory_space<vmem>>, vector<16x6xf32>
    %c0_1 = arith.constant 0 : index
    %c0_2 = arith.constant 0 : index
    %1 = vector.load %arg2[%c0_1, %c0_2] : memref<6x16xf32, #tpu.memory_space<vmem>>, vector<6x16xf32>
    %cst = arith.constant dense<0.000000e+00> : vector<16x16xf32>
    %2 = tpu.matmul %0, %1, %cst {dimension_numbers = #tpu.dot_dimension_numbers<[1], [0], [0], [1], [0, 0, 1, 1], [], []>} : vector<16x6xf32>, vector<6x16xf32>, vector<16x16xf32> -> vector<16x16xf32>
    %c0_3 = arith.constant 0 : index
    %c0_4 = arith.constant 0 : index
    %3 = vector.load %arg3[%c0_3, %c0_4] : memref<1x16xf32, #tpu.memory_space<vmem>>, vector<1x16xf32>
    %4 = vector.broadcast %3 : vector<1x16xf32> to vector<16x16xf32>
    %5 = arith.addf %2, %4 : vector<16x16xf32>
    %cst_5 = arith.constant 0.000000e+00 : f32
    %6 = vector.broadcast %cst_5 : f32 to vector<16x16xf32>
    %7 = arith.maximumf %5, %6 : vector<16x16xf32>
    %c0_6 = arith.constant 0 : index
    %c0_7 = arith.constant 0 : index
    %8 = vector.load %arg4[%c0_6, %c0_7] : memref<16x8xf32, #tpu.memory_space<vmem>>, vector<16x8xf32>
    %cst_8 = arith.constant dense<0.000000e+00> : vector<16x8xf32>
    %9 = tpu.matmul %7, %8, %cst_8 {dimension_numbers = #tpu.dot_dimension_numbers<[1], [0], [0], [1], [0, 0, 1, 1], [], []>} : vector<16x16xf32>, vector<16x8xf32>, vector<16x8xf32> -> vector<16x8xf32>
    %c0_9 = arith.constant 0 : index
    %c0_10 = arith.constant 0 : index
    %10 = vector.load %arg5[%c0_9, %c0_10] : memref<1x8xf32, #tpu.memory_space<vmem>>, vector<1x8xf32>
    %11 = vector.broadcast %10 : vector<1x8xf32> to vector<16x8xf32>
    %12 = arith.addf %9, %11 : vector<16x8xf32>
    %cst_11 = arith.constant 0.000000e+00 : f32
    %13 = vector.broadcast %cst_11 : f32 to vector<16x8xf32>
    %14 = arith.maximumf %12, %13 : vector<16x8xf32>
    %c0_12 = arith.constant 0 : index
    %c0_13 = arith.constant 0 : index
    %15 = vector.load %arg6[%c0_12, %c0_13] : memref<1x8xf32, #tpu.memory_space<vmem>>, vector<1x8xf32>
    %16 = vector.broadcast %15 : vector<1x8xf32> to vector<16x8xf32>
    %17 = arith.mulf %14, %16 : vector<16x8xf32>
    %cst_14 = arith.constant dense<0.000000e+00> : vector<16xf32>
    %18 = vector.multi_reduction <add>, %17, %cst_14 [1] : vector<16x8xf32> to vector<16xf32>
    %19 = vector.shape_cast %18 : vector<16xf32> to vector<16x1xf32>
    %c0_15 = arith.constant 0 : index
    %c0_16 = arith.constant 0 : index
    %20 = vector.load %arg7[%c0_15, %c0_16] : memref<16x1xf32, #tpu.memory_space<vmem>>, vector<16x1xf32>
    %21 = arith.addf %19, %20 : vector<16x1xf32>
    %c0_17 = arith.constant 0 : index
    %c0_18 = arith.constant 0 : index
    %22 = vector.load %arg8[%c0_17, %c0_18] : memref<16x1xf32, #tpu.memory_space<vmem>>, vector<16x1xf32>
    tpu.vector_store %arg8[%c0_17, %c0_18], %21 {strides = array<i32>} : memref<16x1xf32, #tpu.memory_space<vmem>>, vector<16x1xf32>,
    return
  }
  func.func @transform_0(%arg0: i32) -> (i32, i32) {
    %c0_i32 = arith.constant 0 : i32
    %c0_i32_0 = arith.constant 0 : i32
    return %arg0, %c0_i32 : i32, i32
  }
  func.func @transform_1(%arg0: i32) -> (i32, i32) {
    %c0_i32 = arith.constant 0 : i32
    %c0_i32_0 = arith.constant 0 : i32
    %c0_i32_1 = arith.constant 0 : i32
    return %c0_i32, %c0_i32_0 : i32, i32
  }
  func.func @transform_2(%arg0: i32) -> (i32, i32) {
    %c0_i32 = arith.constant 0 : i32
    %c0_i32_0 = arith.constant 0 : i32
    %c0_i32_1 = arith.constant 0 : i32
    return %c0_i32, %c0_i32_0 : i32, i32
  }
  func.func @transform_3(%arg0: i32) -> (i32, i32) {
    %c0_i32 = arith.constant 0 : i32
    %c0_i32_0 = arith.constant 0 : i32
    %c0_i32_1 = arith.constant 0 : i32
    return %c0_i32, %c0_i32_0 : i32, i32
  }
  func.func @transform_4(%arg0: i32) -> (i32, i32) {
    %c0_i32 = arith.constant 0 : i32
    %c0_i32_0 = arith.constant 0 : i32
    %c0_i32_1 = arith.constant 0 : i32
    return %c0_i32, %c0_i32_0 : i32, i32
  }
  func.func @transform_5(%arg0: i32) -> (i32, i32) {
    %c0_i32 = arith.constant 0 : i32
    %c0_i32_0 = arith.constant 0 : i32
    %c0_i32_1 = arith.constant 0 : i32
    return %c0_i32, %c0_i32_0 : i32, i32
  }
  func.func @transform_6(%arg0: i32) -> (i32, i32) {
    %c0_i32 = arith.constant 0 : i32
    %c0_i32_0 = arith.constant 0 : i32
    return %arg0, %c0_i32 : i32, i32
  }
  func.func @transform_7(%arg0: i32) -> (i32, i32) {
    %c0_i32 = arith.constant 0 : i32
    %c0_i32_0 = arith.constant 0 : i32
    return %arg0, %c0_i32 : i32, i32
  }
}

</mosaic_0001>

<llo_original>
// kernel: cnn2_forward.3
$region0: #{cnn2_forward.3}
  #allocation0 [shape = 'u32[]', space=smem, size = 0x4, offset = 0x4, fixed_abs, tag = 'smem constant byte address 0x4 - core index']
  #allocation1 [shape = 'u32[72,128]{1,0:T(1,128)}', space=vmem, size = 0x9000, scoped, tag = 'internal scratch']
  %s0 = inlined_call_operand.vmem [shape: f32[16,6], index: 0, kind: input, shape index: {}]
  %s1 = inlined_call_operand.vmem [shape: f32[6,16], index: 1, kind: input, shape index: {}]
  %s2 = inlined_call_operand.vmem [shape: f32[1,16], index: 2, kind: input, shape index: {}]
  %s3 = inlined_call_operand.vmem [shape: f32[16,8], index: 3, kind: input, shape index: {}]
  %s4 = inlined_call_operand.vmem [shape: f32[1,8], index: 4, kind: input, shape index: {}]
  %s5 = inlined_call_operand.vmem [shape: f32[1,8], index: 5, kind: input, shape index: {}]
  %s6 = inlined_call_operand.vmem [shape: f32[16,1], index: 6, kind: input, shape index: {}]
  %s7 = inlined_call_operand.vmem [shape: f32[16,1], index: 7, kind: output, shape index: {}]
  %s8 = sld [smem:[#allocation0]]
  $region38: #{cnn2_forward.3} parent=0
    _
  %s10 = ssub.s32 1, %s8
  %s11 = scalar_select 0, %s10, %s8
  // Predicated region
  $region2: #{cnn2_forward.3} parent=0 // pred_check
    _
  $region3: #{cnn2_forward.3} parent=0 // pred_check_branch
    %13 = sbr.rel (0) target = $region5
  $region4: #{cnn2_forward.3} parent=0 // pred_region
    _
  $region5: #{cnn2_forward.3} parent=0 // pred_fallthru
    _
  // Predicated region
  $region6: #{cnn2_forward.3} parent=0 // pred_check
    _
  $region7: #{cnn2_forward.3} parent=0 // pred_check_branch
    %15 = sbr.rel (0) target = $region9
  $region8: #{cnn2_forward.3} parent=0 // pred_region
    _
  $region9: #{cnn2_forward.3} parent=0 // pred_fallthru
    _
  // Predicated region
  $region10: #{cnn2_forward.3} parent=0 // pred_check
    _
  $region11: #{cnn2_forward.3} parent=0 // pred_check_branch
    %17 = sbr.rel (0) target = $region13
  $region12: #{cnn2_forward.3} parent=0 // pred_region
    _
  $region13: #{cnn2_forward.3} parent=0 // pred_fallthru
    _
  // Predicated region
  $region14: #{cnn2_forward.3} parent=0 // pred_check
    _
  $region15: #{cnn2_forward.3} parent=0 // pred_check_branch
    %19 = sbr.rel (0) target = $region17
  $region16: #{cnn2_forward.3} parent=0 // pred_region
    _
  $region17: #{cnn2_forward.3} parent=0 // pred_fallthru
    _
  // Predicated region
  $region18: #{cnn2_forward.3} parent=0 // pred_check
    _
  $region19: #{cnn2_forward.3} parent=0 // pred_check_branch
    %21 = sbr.rel (0) target = $region21
  $region20: #{cnn2_forward.3} parent=0 // pred_region
    _
  $region21: #{cnn2_forward.3} parent=0 // pred_fallthru
    _
  // Predicated region
  $region22: #{cnn2_forward.3} parent=0 // pred_check
    _
  $region23: #{cnn2_forward.3} parent=0 // pred_check_branch
    %23 = sbr.rel (0) target = $region25
  $region24: #{cnn2_forward.3} parent=0 // pred_region
    _
  $region25: #{cnn2_forward.3} parent=0 // pred_fallthru
    _
  // Predicated region
  $region26: #{cnn2_forward.3} parent=0 // pred_check
    _
  $region27: #{cnn2_forward.3} parent=0 // pred_check_branch
    %25 = sbr.rel (0) target = $region29
  $region28: #{cnn2_forward.3} parent=0 // pred_region
    _
  $region29: #{cnn2_forward.3} parent=0 // pred_fallthru
    _
  %v26 = vld [vmem:[%s0] sm:$0xff]
  %v27 = vld [vmem:[%s0 + $0x8] sm:$0xff]
  %v28 = vld [vmem:[%s1] sm:$0x3f]
  %v29 = vld [vmem:[%s2] sm:$0x1]
  %v31 = vperm.slane %v29, 0
  %vm33 = vcmask 48128
  %v35 = vsel %vm33, %v26, 0
  %v38 = vsel %vm33, %v27, 0
  %vm40 = vcmask 1045504
  %v42 = vsel %vm40, %v28, 0
  %44 = vmatpush.msra.mxu0 0.0
  %45 = vmatpush.msra.mxu0 0.0
  %46 = vmatpush.msra.mxu0 0.0
  %47 = vmatpush.msra.mxu0 0.0
  %48 = vmatpush.msra.mxu0 0.0
  %49 = vmatpush.msra.mxu0 0.0
  %50 = vmatpush.msra.mxu0 0.0
  %51 = vmatpush.msra.mxu0 0.0
  %52 = vmatpush.msra.mxu0 0.0
  %53 = vmatpush.msra.mxu0 0.0
  %54 = vmatpush.msra.mxu0 0.0
  %55 = vmatpush.msra.mxu0 0.0
  %56 = vmatpush.msra.mxu0 0.0
  %57 = vmatpush.msra.mxu0 0.0
  %58 = vmatpush.msra.mxu0 0.0
  %59 = vmatpush.msra.mxu0 %v42
  %60 = vmatmul.f32.gmra.mxu0 %v35
  %v61 = vpop.f32.mrf.mxu0
  %v62 = vadd.f32 %v31, %v61
  %63 = vmatmul.f32.gmra.mxu0 %v38
  %v64 = vpop.f32.mrf.mxu0
  %v65 = vadd.f32 %v31, %v64
  %66 = vdwg.mxu0
  %v67 = vmax.f32 %v62, 0.0
  %v68 = vmax.f32 %v65, 0.0
  %v69 = vld [vmem:[%s3] sm:$0xff]
  %v70 = vld [vmem:[%s3 + $0x8] sm:$0xff]
  %v71 = vld [vmem:[%s4] sm:$0x1]
  %v73 = vperm.slane %v71, 0
  %vm75 = vcmask 130048
  %v77 = vsel %vm75, %v67, 0
  %v80 = vsel %vm75, %v68, 0
  %82 = vmatpush.msra.mxu0 0.0
  %83 = vmatpush.msra.mxu0 0.0
  %84 = vmatpush.msra.mxu0 0.0
  %85 = vmatpush.msra.mxu0 0.0
  %86 = vmatpush.msra.mxu0 0.0
  %87 = vmatpush.msra.mxu0 0.0
  %88 = vmatpush.msra.mxu0 0.0
  %89 = vmatpush.msra.mxu0 0.0
  %90 = vmatpush.msra.mxu0 0.0
  %91 = vmatpush.msra.mxu0 0.0
  %92 = vmatpush.msra.mxu0 0.0
  %93 = vmatpush.msra.mxu0 0.0
  %94 = vmatpush.msra.mxu0 0.0
  %95 = vmatpush.msra.mxu0 0.0
  %96 = vmatpush.msra.mxu0 %v70
  %97 = vmatpush.msra.mxu0 %v69
  %98 = vmatmul.f32.gmra.mxu0 %v77
  %v99 = vpop.f32.mrf.mxu0
  %v100 = vadd.f32 %v73, %v99
  %101 = vmatmul.f32.gmra.mxu0 %v80
  %v102 = vpop.f32.mrf.mxu0
  %v103 = vadd.f32 %v73, %v102
  %104 = vdwg.mxu0
  %v105 = vmax.f32 %v100, 0.0
  %v106 = vmax.f32 %v103, 0.0
  %v107 = vld [vmem:[%s5] sm:$0x1]
  %v109 = vperm.slane %v107, 0
  %v111 = vmul.f32 %v105, %v109
  %v112 = vmul.f32 %v106, %v109
  %vm113 = vcmask 64512
  %v114 = vsel %vm113, %v111, 0.0
  %115 = vadd.xlane.f32.xlu0 %v114
  %v116 = vpop.xlane.xlu0 %115
  %v117 = vsel %vm113, %v112, 0.0
  %118 = vadd.xlane.f32.xlu0 %v117
  %v119 = vpop.xlane.xlu0 %118
  %v120 = vld [vmem:[%s6] sm:$0xff]
  %v121 = vld [vmem:[%s6 + $0x8] sm:$0xff]
  %v122 = vadd.f32 %v116, %v120
  %v123 = vadd.f32 %v119, %v121
  %vm124 = vcmask 7168
  %125 = vst.msk [vmem:[%s7] sm:$0xff] %vm124, %v122
  %126 = vst.msk [vmem:[%s7 + $0x8] sm:$0xff] %vm124, %v123
  // Predicated region
  $region30: #{cnn2_forward.3} parent=0 // pred_check
    _
  $region31: #{cnn2_forward.3} parent=0 // pred_check_branch
    %128 = sbr.rel (0) target = $region33
  $region32: #{cnn2_forward.3} parent=0 // pred_region
    _
  $region33: #{cnn2_forward.3} parent=0 // pred_fallthru
    _
  // Predicated region
  $region34: #{cnn2_forward.3} parent=0 // pred_check
    _
  $region35: #{cnn2_forward.3} parent=0 // pred_check_branch
    %130 = sbr.rel (0) target = $region37
  $region36: #{cnn2_forward.3} parent=0 // pred_region
    _
  $region37: #{cnn2_forward.3} parent=0 // pred_fallthru
    _

// kernel: cnn2_forward.2
$region0: #{cnn2_forward.2}
  #allocation0 [shape = 'u32[]', space=smem, size = 0x4, offset = 0x4, fixed_abs, tag = 'smem constant byte address 0x4 - core index']
  #allocation1 [shape = 'u32[72,128]{1,0:T(1,128)}', space=vmem, size = 0x9000, scoped, tag = 'internal scratch']
  %s0 = inlined_call_operand.vmem [shape: f32[2,18,4], index: 0, kind: input, shape index: {}]
  %s1 = inlined_call_operand.vmem [shape: f32[3,4,8], index: 1, kind: input, shape index: {}]
  %s2 = inlined_call_operand.vmem [shape: f32[1,8], index: 2, kind: input, shape index: {}]
  %s3 = inlined_call_operand.vmem [shape: f32[1,8], index: 3, kind: input, shape index: {}]
  %s4 = inlined_call_operand.vmem [shape: f32[2,16,1], index: 4, kind: output, shape index: {}]
  %s5 = sld [smem:[#allocation0]]
  $region49: #{cnn2_forward.2} parent=0
    _
  %s7 = ssub.s32 1, %s5
  %s8 = scalar_select 0, %s7, %s5
  loop: start=0, step=1, limit=4
  $region2: #{cnn2_forward.2} parent=0 // loop_pre_header
    _
  $region3: #{cnn2_forward.2} parent=0 // loop_header
    %s10 = sphi 0, %s14
    %p11 = scmp.ge.s32.totalorder %s10, 4
    %s20 = sphi 0, %s22
    %s23 = sphi 0, %s20
    %s24 = sphi 0, %s23
    %s40 = sphi 0, %s24
    %s44 = sphi 0, %s44
    %s46 = sphi 0, %s44
    %s47 = sphi 0, %s46
    %s61 = sphi 0, %s47
    %s65 = sphi 0, %s65
    %s67 = sphi 0, %s65
    %s68 = sphi 0, %s67
    %s82 = sphi 0, %s68
    %s86 = sphi 0, %s86
    %s88 = sphi 0, %s86
    %s89 = sphi 0, %s88
    %s103 = sphi 0, %s89
    %s109 = sphi 0, %s111
    %s112 = sphi 0, %s109
    %s113 = sphi 0, %s112
    %s129 = sphi 0, %s113
  $region4: #{cnn2_forward.2} parent=0 // loop_header_branch
    %13 = sbr.rel (%p11) target = $region8
  $region5: #{cnn2_forward.2} parent=0 // loop_body
    %s15 = ssub.s32 %s10, 1
    %s16 = ssub.s32 %s10, 2
    %s17 = sadd.s32 %s10, 1
    %s18 = ssub.s32 %s10, %s17
    %p19 = scmp.eq.s32.totalorder %s18, 0
    %s21 = sadd.s32 %s20, 1
    %s22 = scalar_select %p19, %s20, %s21
    %p25 = pneg %p19
    %p26 = scmp.eq.s32.totalorder %s10, 1
    %p27 = por %p25, %p26
    %p28 = scmp.ne.s32.totalorder %s20, %s23
    %p29 = scmp.eq.s32.totalorder %s10, 0
    %p30 = por %p28, %p29
    %p31 = scmp.ne.s32.totalorder %s20, %s23
    %p32 = scmp.eq.s32.totalorder %s15, 1
    %p33 = por %p31, %p32
    %p34 = scmp.ne.s32.totalorder %s23, %s24
    %p35 = scmp.eq.s32.totalorder %s15, 0
    %p36 = por %p34, %p35
    %p37 = scmp.ne.s32.totalorder %s23, %s24
    %p38 = scmp.eq.s32.totalorder %s16, 1
    %p39 = por %p37, %p38
    %p41 = scmp.ne.s32.totalorder %s24, %s40
    %p42 = scmp.eq.s32.totalorder %s16, 0
    %p43 = por %p41, %p42
    %s45 = sadd.s32 %s44, 1
    %p48 = scmp.eq.s32.totalorder %s10, 1
    %p49 = scmp.ne.s32.totalorder %s44, %s46
    %p50 = scmp.eq.s32.totalorder %s10, 0
    %p51 = por %p49, %p50
    %p52 = scmp.ne.s32.totalorder %s44, %s46
    %p53 = scmp.eq.s32.totalorder %s15, 1
    %p54 = por %p52, %p53
    %p55 = scmp.ne.s32.totalorder %s46, %s47
    %p56 = scmp.eq.s32.totalorder %s15, 0
    %p57 = por %p55, %p56
    %p58 = scmp.ne.s32.totalorder %s46, %s47
    %p59 = scmp.eq.s32.totalorder %s16, 1
    %p60 = por %p58, %p59
    %p62 = scmp.ne.s32.totalorder %s47, %s61
    %p63 = scmp.eq.s32.totalorder %s16, 0
    %p64 = por %p62, %p63
    %s66 = sadd.s32 %s65, 1
    %p69 = scmp.eq.s32.totalorder %s10, 1
    %p70 = scmp.ne.s32.totalorder %s65, %s67
    %p71 = scmp.eq.s32.totalorder %s10, 0
    %p72 = por %p70, %p71
    %p73 = scmp.ne.s32.totalorder %s65, %s67
    %p74 = scmp.eq.s32.totalorder %s15, 1
    %p75 = por %p73, %p74
    %p76 = scmp.ne.s32.totalorder %s67, %s68
    %p77 = scmp.eq.s32.totalorder %s15, 0
    %p78 = por %p76, %p77
    %p79 = scmp.ne.s32.totalorder %s67, %s68
    %p80 = scmp.eq.s32.totalorder %s16, 1
    %p81 = por %p79, %p80
    %p83 = scmp.ne.s32.totalorder %s68, %s82
    %p84 = scmp.eq.s32.totalorder %s16, 0
    %p85 = por %p83, %p84
    %s87 = sadd.s32 %s86, 1
    %p90 = scmp.eq.s32.totalorder %s10, 1
    %p91 = scmp.ne.s32.totalorder %s86, %s88
    %p92 = scmp.eq.s32.totalorder %s10, 0
    %p93 = por %p91, %p92
    %p94 = scmp.ne.s32.totalorder %s86, %s88
    %p95 = scmp.eq.s32.totalorder %s15, 1
    %p96 = por %p94, %p95
    %p97 = scmp.ne.s32.totalorder %s88, %s89
    %p98 = scmp.eq.s32.totalorder %s15, 0
    %p99 = por %p97, %p98
    %p100 = scmp.ne.s32.totalorder %s88, %s89
    %p101 = scmp.eq.s32.totalorder %s16, 1
    %p102 = por %p100, %p101
    %p104 = scmp.ne.s32.totalorder %s89, %s103
    %p105 = scmp.eq.s32.totalorder %s16, 0
    %p106 = por %p104, %p105
    %s107 = ssub.s32 %s10, %s17
    %p108 = scmp.eq.s32.totalorder %s107, 0
    %s110 = sadd.s32 %s109, 1
    %s111 = scalar_select %p108, %s109, %s110
    %p114 = pneg %p108
    %p115 = scmp.eq.s32.totalorder %s10, 1
    %p116 = por %p114, %p115
    %p117 = scmp.ne.s32.totalorder %s109, %s112
    %p118 = scmp.eq.s32.totalorder %s10, 0
    %p119 = por %p117, %p118
    %p120 = scmp.ne.s32.totalorder %s109, %s112
    %p121 = scmp.eq.s32.totalorder %s15, 1
    %p122 = por %p120, %p121
    %p123 = scmp.ne.s32.totalorder %s112, %s113
    %p124 = scmp.eq.s32.totalorder %s15, 0
    %p125 = por %p123, %p124
    %p126 = scmp.ne.s32.totalorder %s112, %s113
    %p127 = scmp.eq.s32.totalorder %s16, 1
    %p128 = por %p126, %p127
    %p130 = scmp.ne.s32.totalorder %s113, %s129
    %p131 = scmp.eq.s32.totalorder %s16, 0
    %p132 = por %p130, %p131
    %p133 = scmp.le.s32.totalorder 1, %s10
    %p134 = scmp.lt.s32.totalorder %s10, 3
    %p135 = pnand %p133, %p134
    %p136 = pneg %p135
    // Predicated region
    $region9: #{cnn2_forward.2} parent=5 // pred_check
      _
    $region10: #{cnn2_forward.2} parent=5 // pred_check_branch
      %138 = sbr.rel (%p135) target = $region12
    $region11: #{cnn2_forward.2} parent=5 // pred_region
      %s139 = ssub.s32 %s10, 1
      // Predicated region
      $region13: #{cnn2_forward.2} parent=11 // pred_check
        %p140 = pneg %p57
      $region14: #{cnn2_forward.2} parent=11 // pred_check_branch
        %142 = sbr.rel (%p140) target = $region16
      $region15: #{cnn2_forward.2} parent=11 // pred_region
        _
      $region16: #{cnn2_forward.2} parent=11 // pred_fallthru
        _
      // Predicated region
      $region17: #{cnn2_forward.2} parent=11 // pred_check
        %p143 = pneg %p78
      $region18: #{cnn2_forward.2} parent=11 // pred_check_branch
        %145 = sbr.rel (%p143) target = $region20
      $region19: #{cnn2_forward.2} parent=11 // pred_region
        _
      $region20: #{cnn2_forward.2} parent=11 // pred_fallthru
        _
      // Predicated region
      $region21: #{cnn2_forward.2} parent=11 // pred_check
        %p146 = pneg %p99
      $region22: #{cnn2_forward.2} parent=11 // pred_check_branch
        %148 = sbr.rel (%p146) target = $region24
      $region23: #{cnn2_forward.2} parent=11 // pred_region
        _
      $region24: #{cnn2_forward.2} parent=11 // pred_fallthru
        _
    $region12: #{cnn2_forward.2} parent=5 // pred_fallthru
      _
    %p149 = scmp.lt.s32.totalorder %s10, 2
    // Predicated region
    $region25: #{cnn2_forward.2} parent=5 // pred_check
      %p150 = pneg %p149
    $region26: #{cnn2_forward.2} parent=5 // pred_check_branch
      %152 = sbr.rel (%p150) target = $region28
    $region27: #{cnn2_forward.2} parent=5 // pred_region
      // Predicated region
      $region29: #{cnn2_forward.2} parent=27 // pred_check
        %p153 = pneg %p30
      $region30: #{cnn2_forward.2} parent=27 // pred_check_branch
        %155 = sbr.rel (%p153) target = $region32
      $region31: #{cnn2_forward.2} parent=27 // pred_region
        %p156 = scmp.lt.s32.totalorder %s10, 1
        %s157 = scalar_select %p156, %s10, 1
        %s158 = smul.addr %s157, 3
        %s159 = smul.addr %s158, 8
        %s160 = scalar_lea.vmem %s0, %s159
      $region32: #{cnn2_forward.2} parent=27 // pred_fallthru
        _
    $region28: #{cnn2_forward.2} parent=5 // pred_fallthru
      _
    %p161 = scmp.le.s32.totalorder 1, %s10
    %p162 = scmp.lt.s32.totalorder %s10, 3
    %p163 = pnand %p161, %p162
    %p164 = pneg %p163
    // Predicated region
    $region33: #{cnn2_forward.2} parent=5 // pred_check
      _
    $region34: #{cnn2_forward.2} parent=5 // pred_check_branch
      %166 = sbr.rel (%p163) target = $region36
    $region35: #{cnn2_forward.2} parent=5 // pred_region
      %s167 = ssub.s32 %s10, 1
      %p168 = scmp.lt.s32.totalorder %s15, 1
      %s169 = scalar_select %p168, %s15, 1
      %s170 = smul.addr %s169, 3
      %s171 = smul.addr %s170, 8
      %s172 = scalar_lea.vmem %s0, %s171
      %p173 = pneg %p36
      %p174 = pneg %p33
      %p175 = pneg %p57
      %p176 = pneg %p54
      %p177 = pneg %p78
      %p178 = pneg %p75
      %p179 = pneg %p99
      %p180 = pneg %p96
      %p181 = pneg %p125
      %p182 = pneg %p122
      %p183 = scmp.lt.s32.totalorder %s15, 1
      %s184 = scalar_select %p183, %s15, 1
      %s185 = smul.addr %s184, 2
      %s186 = smul.addr %s185, 8
      %s187 = scalar_lea.vmem %s4, %s186
      %p188 = scmp.lt.s32.totalorder %s15, 1
      %s189 = scalar_select %p188, %s15, 1
      %s190 = smul.addr %s189, 3
      %s191 = smul.addr %s190, 8
      %s192 = scalar_lea.vmem %s0, %s191
      %p193 = scmp.lt.s32.totalorder %s15, 1
      %s194 = scalar_select %p193, %s15, 1
      %s195 = smul.addr %s194, 2
      %s196 = smul.addr %s195, 8
      %s197 = scalar_lea.vmem %s4, %s196
      %v198 = vld [vmem:[%s192] sm:$0xff]
      %v199 = vld [vmem:[%s192 + $0x8] sm:$0xff]
      %v200 = vld [vmem:[%s192 + $0x10] sm:$0x3]
      %v201 = vld [vmem:[%s1] sm:$0xf]
      %s202 = scalar_lea.vmem %s1, 4
      %v203 = vld [vmem:[%s202] sm:$0xf]
      %vm207 = vcmask 1046528
      %v208 = vrot.slane %v198, 1
      %v209 = vrot.slane %v199, 1
      %v210 = vsel %vm207, %v208, %v209
      %v211 = vrot.slane %v200, 1
      %v212 = vsel %vm207, %v209, %v211
      %vm213 = vcmask 31744
      %v214 = vsel %vm213, %v210, 0
      %v216 = vsel %vm213, %v212, 0
      %vm218 = vcmask 1043456
      %v220 = vsel %vm218, %v203, 0
      %222 = vmatpush.msra.mxu0 0.0
      %223 = vmatpush.msra.mxu0 0.0
      %224 = vmatpush.msra.mxu0 0.0
      %225 = vmatpush.msra.mxu0 0.0
      %226 = vmatpush.msra.mxu0 0.0
      %227 = vmatpush.msra.mxu0 0.0
      %228 = vmatpush.msra.mxu0 0.0
      %229 = vmatpush.msra.mxu0 0.0
      %230 = vmatpush.msra.mxu0 0.0
      %231 = vmatpush.msra.mxu0 0.0
      %232 = vmatpush.msra.mxu0 0.0
      %233 = vmatpush.msra.mxu0 0.0
      %234 = vmatpush.msra.mxu0 0.0
      %235 = vmatpush.msra.mxu0 0.0
      %236 = vmatpush.msra.mxu0 0.0
      %237 = vmatpush.msra.mxu0 %v220
      %238 = vmatmul.f32.gmra.mxu0 %v214
      %v239 = vpop.f32.mrf.mxu0
      %v240 = vadd.f32 0.0, %v239
      %241 = vmatmul.f32.gmra.mxu0 %v216
      %v242 = vpop.f32.mrf.mxu0
      %v243 = vadd.f32 0.0, %v242
      %244 = vdwg.mxu0
      %v245 = vsel %vm213, %v198, 0
      %v247 = vsel %vm213, %v199, 0
      %v250 = vsel %vm218, %v201, 0
      %252 = vmatpush.msra.mxu0 0.0
      %253 = vmatpush.msra.mxu0 0.0
      %254 = vmatpush.msra.mxu0 0.0
      %255 = vmatpush.msra.mxu0 0.0
      %256 = vmatpush.msra.mxu0 0.0
      %257 = vmatpush.msra.mxu0 0.0
      %258 = vmatpush.msra.mxu0 0.0
      %259 = vmatpush.msra.mxu0 0.0
      %260 = vmatpush.msra.mxu0 0.0
      %261 = vmatpush.msra.mxu0 0.0
      %262 = vmatpush.msra.mxu0 0.0
      %263 = vmatpush.msra.mxu0 0.0
      %264 = vmatpush.msra.mxu0 0.0
      %265 = vmatpush.msra.mxu0 0.0
      %266 = vmatpush.msra.mxu0 0.0
      %267 = vmatpush.msra.mxu0 %v250
      %268 = vmatmul.f32.gmra.mxu0 %v245
      %v269 = vpop.f32.mrf.mxu0
      %v270 = vadd.f32 %v240, %v269
      %271 = vmatmul.f32.gmra.mxu0 %v247
      %v272 = vpop.f32.mrf.mxu0
      %v273 = vadd.f32 %v243, %v272
      %274 = vdwg.mxu0
      %s275 = scalar_lea.vmem %s1, 8
      %v276 = vld [vmem:[%s275] sm:$0xf]
      %vm277 = vcmask 1045504
      %v278 = vrot.slane %v198, 2
      %v279 = vrot.slane %v199, 2
      %v280 = vsel %vm277, %v278, %v279
      %v281 = vrot.slane %v200, 2
      %v282 = vsel %vm277, %v279, %v281
      %v283 = vsel %vm213, %v280, 0
      %v285 = vsel %vm213, %v282, 0
      %v288 = vsel %vm218, %v276, 0
      %290 = vmatpush.msra.mxu0 0.0
      %291 = vmatpush.msra.mxu0 0.0
      %292 = vmatpush.msra.mxu0 0.0
      %293 = vmatpush.msra.mxu0 0.0
      %294 = vmatpush.msra.mxu0 0.0
      %295 = vmatpush.msra.mxu0 0.0
      %296 = vmatpush.msra.mxu0 0.0
      %297 = vmatpush.msra.mxu0 0.0
      %298 = vmatpush.msra.mxu0 0.0
      %299 = vmatpush.msra.mxu0 0.0
      %300 = vmatpush.msra.mxu0 0.0
      %301 = vmatpush.msra.mxu0 0.0
      %302 = vmatpush.msra.mxu0 0.0
      %303 = vmatpush.msra.mxu0 0.0
      %304 = vmatpush.msra.mxu0 0.0
      %305 = vmatpush.msra.mxu0 %v288
      %306 = vmatmul.f32.gmra.mxu0 %v283
      %v307 = vpop.f32.mrf.mxu0
      %v308 = vadd.f32 0.0, %v307
      %309 = vmatmul.f32.gmra.mxu0 %v285
      %v310 = vpop.f32.mrf.mxu0
      %v311 = vadd.f32 0.0, %v310
      %312 = vdwg.mxu0
      %v313 = vadd.f32 %v270, %v308
      %v314 = vadd.f32 %v273, %v311
      %v315 = vld [vmem:[%s2] sm:$0x1]
      %v317 = vperm.slane %v315, 0
      %v319 = vadd.f32 %v313, %v317
      %v320 = vadd.f32 %v314, %v317
      %v321 = vmax.f32 %v319, 0.0
      %v322 = vmax.f32 %v320, 0.0
      %v323 = vld [vmem:[%s3] sm:$0x1]
      %v325 = vperm.slane %v323, 0
      %v327 = vmul.f32 %v321, %v325
      %v328 = vmul.f32 %v322, %v325
      %vm329 = vcmask 64512
      %v330 = vsel %vm329, %v327, 0.0
      %331 = vadd.xlane.f32.xlu0 %v330
      %v332 = vpop.xlane.xlu0 %331
      %v333 = vsel %vm329, %v328, 0.0
      %334 = vadd.xlane.f32.xlu0 %v333
      %v335 = vpop.xlane.xlu0 %334
      %vm336 = vcmask 7168
      %337 = vst.msk [vmem:[%s197] sm:$0xff] %vm336, %v332
      %338 = vst.msk [vmem:[%s197 + $0x8] sm:$0xff] %vm336, %v335
      %p339 = scmp.lt.s32.totalorder %s15, 1
      %s340 = scalar_select %p339, %s15, 1
      %s341 = smul.addr %s340, 2
      %s342 = smul.addr %s341, 8
      %s343 = scalar_lea.vmem %s4, %s342
      // Predicated region
      $region37: #{cnn2_forward.2} parent=35 // pred_check
        %p344 = pneg %p122
      $region38: #{cnn2_forward.2} parent=35 // pred_check_branch
        %346 = sbr.rel (%p344) target = $region40
      $region39: #{cnn2_forward.2} parent=35 // pred_region
        _
      $region40: #{cnn2_forward.2} parent=35 // pred_fallthru
        _
    $region36: #{cnn2_forward.2} parent=5 // pred_fallthru
      _
    %p347 = scmp.le.s32.totalorder 2, %s10
    // Predicated region
    $region41: #{cnn2_forward.2} parent=5 // pred_check
      %p348 = pneg %p347
    $region42: #{cnn2_forward.2} parent=5 // pred_check_branch
      %350 = sbr.rel (%p348) target = $region44
    $region43: #{cnn2_forward.2} parent=5 // pred_region
      %s351 = ssub.s32 %s10, 2
      // Predicated region
      $region45: #{cnn2_forward.2} parent=43 // pred_check
        %p352 = pneg %p128
      $region46: #{cnn2_forward.2} parent=43 // pred_check_branch
        %354 = sbr.rel (%p352) target = $region48
      $region47: #{cnn2_forward.2} parent=43 // pred_region
        %p355 = scmp.lt.s32.totalorder %s16, 1
        %s356 = scalar_select %p355, %s16, 1
        %s357 = smul.addr %s356, 2
        %s358 = smul.addr %s357, 8
        %s359 = scalar_lea.vmem %s4, %s358
      $region48: #{cnn2_forward.2} parent=43 // pred_fallthru
        _
    $region44: #{cnn2_forward.2} parent=5 // pred_fallthru
      _
  $region6: #{cnn2_forward.2} parent=0 // loop_footer
    %s14 = sadd.s32 1, %s10
  $region7: #{cnn2_forward.2} parent=0 // loop_footer_branch
    %9 = sbr.rel target = $region3
  $region8: #{cnn2_forward.2} parent=0 // loop_exit
    _

</llo_original>
